<compile_context>
chip_gen: v7x
topology: tpu7x:2x2x1
jax: 0.10.0
libtpu: 0.0.40
codegen_flags: <defaults>
</compile_context>

<pallas_src>
import functools
import numpy as np
import jax
import jax.numpy as jnp
from jax import lax
from jax.experimental import pallas as pl
from jax.experimental.pallas import tpu as pltpu


def _round_up(a, b):
    return (a + b - 1) // b * b


def _vq_kernel(x_ref, w_ref, b_ref, vhi_ref, vlo_ref,
               out_x_ref, hard_ref, avg_ref, *,
               groups, num_vars, vp, n_rows, tile_rows, mask_rows, mxu_dtype):
    """One grid step processes one independent tile of rows.

    x_ref    : (TN, F)         input rows, native dtype (cast to mxu_dtype in-kernel)
    w_ref    : (F, G*Vp)       projection weight, transposed + lane-padded
    b_ref    : (1, G*Vp)       projection bias, pad lanes = -1e30 (f32)
    vhi_ref  : (G*Vp, vq_dim)  block-diagonal codebook, bf16 high part
    vlo_ref  : (G*Vp, vq_dim)  block-diagonal codebook, bf16 residual part
    out_x_ref: (TN, vq_dim)    quantized output rows (f32)
    hard_ref : (8, G*Vp)       per-tile partial one-hot counts (row 0 = the sum)
    avg_ref  : (8, G*Vp)       per-tile partial softmax-prob sums
    """
    i = pl.program_id(0)

    xa = x_ref[...]
    if xa.dtype != mxu_dtype:
        # NOTE: bf16 MXU operands can in principle flip a near-tied argmax vs.
        # the f32 PyTorch module; pass mxu_dtype=jnp.float32 for exact logits.
        xa = xa.astype(mxu_dtype)

    # Linear projection on the MXU, f32 accumulation; pad columns give -1e30.
    logits = jnp.dot(xa, w_ref[...],
                     preferred_element_type=jnp.float32) + b_ref[...]
    tn = logits.shape[0]
    vq_dim = out_x_ref.shape[-1]

    # Small (1, Vp) lane iota reused for every group (group-relative indices).
    lane = lax.broadcasted_iota(jnp.int32, (1, vp), 1)

    if mask_rows:
        row = lax.broadcasted_iota(jnp.int32, (tn, 1), 0) + i * tile_rows
        valid = row < n_rows          # ragged last tile: OOB rows may be garbage
    else:
        valid = None

    acc = jnp.zeros((tn, vq_dim), jnp.float32)
    for g in range(groups):
        gsl = slice(g * vp, (g + 1) * vp)
        lg = logits[:, gsl]                                   # 128-aligned slice
        mg = jnp.max(lg, axis=-1, keepdims=True)              # (TN, 1)
        # First-occurrence argmax (matches torch.max tie-breaking).
        # TODO(synk): if exact logit ties are known impossible, (lg == mg) alone
        # would save one XLU lane-reduction per group.
        fg = jnp.min(jnp.where(lg == mg, lane, vp), axis=-1, keepdims=True)
        hard_g = (lane == fg).astype(jnp.float32)             # (TN, Vp)
        eg = jnp.exp(lg - mg)                                 # pad lanes -> 0
        pg = eg * pl.reciprocal(jnp.sum(eg, axis=-1, keepdims=True), approx=True)

        if valid is not None:
            # where (not multiply) so NaNs from garbage OOB rows cannot leak in.
            hard_s = jnp.where(valid, hard_g, 0.0)
            pg_s = jnp.where(valid, pg, 0.0)
        else:
            hard_s, pg_s = hard_g, pg

        hard_ref[:, gsl] = jnp.broadcast_to(
            jnp.sum(hard_s, axis=0, keepdims=True), (8, vp))
        avg_ref[:, gsl] = jnp.broadcast_to(
            jnp.sum(pg_s, axis=0, keepdims=True), (8, vp))

        # Codebook lookup: bf16 MXU matmuls against the block-diagonal codebook
        # slices.  One-hot rows are exact in bf16; the hi + lo residual split
        # keeps ~f32 output precision.  Single lane-dense (TN, vq_dim) store.
        hb = hard_g.astype(jnp.bfloat16)
        acc = acc + jnp.dot(hb, vhi_ref[gsl, :], preferred_element_type=jnp.float32)
        acc = acc + jnp.dot(hb, vlo_ref[gsl, :], preferred_element_type=jnp.float32)

    out_x_ref[...] = acc


def gumbel_vq_forward(x, weight_t, bias, code_vars, *,
                      groups, num_vars, vq_dim, curr_temp,
                      tile_rows=None, mxu_dtype=jnp.bfloat16):
    """Pallas implementation of GumbelVectorQuantizer.forward (eval path).

    x         : (bsz, tsz, input_dim)
    weight_t  : (input_dim, groups*num_vars)   -- weight_proj.weight.T
    bias      : (groups*num_vars,)
    code_vars : (1, groups*num_vars, var_dim)  -- self.vars
    """
    bsz, tsz, fsz = x.shape
    var_dim = vq_dim // groups
    n = bsz * tsz
    vp = _round_up(num_vars, 128)          # per-group lane-padded width
    gvp = groups * vp

    # ---- parameter prep (small, traced once per call) ----
    w3 = weight_t.astype(jnp.float32).reshape(fsz, groups, num_vars)
    w_pad = jnp.zeros((fsz, groups, vp), jnp.float32).at[:, :, :num_vars].set(w3)
    w2 = w_pad.reshape(fsz, gvp).astype(mxu_dtype)

    b_pad = jnp.full((groups, vp), -1e30, jnp.float32)
    b_pad = b_pad.at[:, :num_vars].set(
        bias.reshape(groups, num_vars).astype(jnp.float32))
    b2 = b_pad.reshape(1, gvp)

    v3 = code_vars.reshape(groups, num_vars, var_dim).astype(jnp.float32)
    vbd = jnp.zeros((groups, vp, vq_dim), jnp.float32)
    for g in range(groups):
        vbd = vbd.at[g, :num_vars, g * var_dim:(g + 1) * var_dim].set(v3[g])
    vbd = vbd.reshape(gvp, vq_dim)
    vbd_hi = vbd.astype(jnp.bfloat16)
    vbd_lo = (vbd - vbd_hi.astype(jnp.float32)).astype(jnp.bfloat16)

    # x stays in its native dtype: no wrapper-side cast/pad HBM round trip.
    x2 = x.reshape(n, fsz)
    itemsize_x = jnp.dtype(x2.dtype).itemsize

    # ---- tiling: budget the in-kernel live temporaries, not just DMA blocks ----
    per_row_bytes = 4 * (gvp + 3 * vp + 2 * vq_dim) + fsz * (itemsize_x + 2)
    if tile_rows is None:
        tile_rows = int(min(512, max(8, (8 * 2 ** 20) // per_row_bytes)))
    tile_rows = max(8, min(_round_up(tile_rows, 8), _round_up(n, 8)))
    num_tiles = -(-n // tile_rows)

    const_bytes = fsz * gvp * 2 + gvp * 4 + 2 * gvp * vq_dim * 2
    est = (2 * tile_rows * fsz * itemsize_x          # x tile (double-buffered)
           + 2 * tile_rows * vq_dim * 4              # out_x tile
           + 2 * 2 * 8 * gvp * 4                     # hard/avg partial blocks
           + 2 * const_bytes                         # resident operands
           + tile_rows * per_row_bytes)              # live temporaries headroom
    vmem_limit = int(min(max(2 * est, 16 * 2 ** 20), 48 * 2 ** 20))  # 48MiB ok on v7x

    kernel = functools.partial(
        _vq_kernel, groups=groups, num_vars=num_vars, vp=vp, n_rows=n,
        tile_rows=tile_rows, mask_rows=(n % tile_rows != 0), mxu_dtype=mxu_dtype)

    # TODO(synk): pipeline_mode=pl.Buffered(1) on the constant-index operands
    # (w2/b2/vbd_*) would save ~1 MiB VMEM; left at default for lowering safety.
    out_x, hard_part, avg_part = pl.pallas_call(
        kernel,
        out_shape=(
            jax.ShapeDtypeStruct((n, vq_dim), jnp.float32),
            jax.ShapeDtypeStruct((num_tiles * 8, gvp), jnp.float32),
            jax.ShapeDtypeStruct((num_tiles * 8, gvp), jnp.float32),
        ),
        grid_spec=pltpu.PrefetchScalarGridSpec(
            num_scalar_prefetch=0,
            grid=(num_tiles,),
            in_specs=[
                pl.BlockSpec((tile_rows, fsz), lambda i: (i, 0)),
                pl.BlockSpec((fsz, gvp), lambda i: (0, 0)),
                pl.BlockSpec((1, gvp), lambda i: (0, 0)),
                pl.BlockSpec((gvp, vq_dim), lambda i: (0, 0)),
                pl.BlockSpec((gvp, vq_dim), lambda i: (0, 0)),
            ],
            out_specs=[
                pl.BlockSpec((tile_rows, vq_dim), lambda i: (i, 0)),
                pl.BlockSpec((8, gvp), lambda i: (i, 0)),
                pl.BlockSpec((8, gvp), lambda i: (i, 0)),
            ],
        ),
        # No carried accumulators -> tiles are fully independent; "parallel"
        # lets v7x megacore shard the row axis across both TensorCores.
        compiler_params=pltpu.CompilerParams(
            dimension_semantics=("parallel",),
            vmem_limit_bytes=vmem_limit),
    )(x2, w2, b2, vbd_hi, vbd_lo)

    # Tiny (tiles, G*Vp) -> (G, V) reductions kept as JAX glue.
    inv_n = 1.0 / n
    hard_counts = hard_part.reshape(num_tiles, 8, gvp)[:, 0, :].sum(axis=0)
    avg_sums = avg_part.reshape(num_tiles, 8, gvp)[:, 0, :].sum(axis=0)
    hard_probs = hard_counts.reshape(groups, vp)[:, :num_vars] * inv_n
    avg_probs = avg_sums.reshape(groups, vp)[:, :num_vars] * inv_n

    code_perplexity = jnp.exp(
        -jnp.sum(hard_probs * jnp.log(hard_probs + 1e-7), axis=-1)).sum()
    prob_perplex = jnp.exp(
        -jnp.sum(avg_probs * jnp.log(avg_probs + 1e-7), axis=-1)).sum()

    # TODO(synk): training-mode gumbel_softmax (random gumbel noise + straight-
    # through) not implemented; this reproduces the eval (hard one-hot) path.
    return {
        "num_vars": num_vars * groups,
        "temp": curr_temp,
        "code_perplexity": code_perplexity,
        "prob_perplex": prob_perplex,
        "x": out_x.reshape(bsz, tsz, vq_dim),
    }


def _reference_forward(x, weight_t, bias, code_vars, groups, num_vars, vq_dim):
    """Pure-JAX replica of the PyTorch eval forward, for verification."""
    bsz, tsz, fsz = x.shape
    var_dim = vq_dim // groups
    n = bsz * tsz
    xf = x.reshape(n, fsz).astype(jnp.float32)
    wf = weight_t.astype(jnp.float32)
    logits = xf @ wf + bias.reshape(1, -1).astype(jnp.float32)  # (n, G*V)
    lg = logits.reshape(n, groups, num_vars)
    k = jnp.argmax(lg, axis=-1)
    hard = jax.nn.one_hot(k, num_vars, dtype=jnp.float32)       # (n, G, V)
    hard_probs = hard.mean(axis=0)
    avg_probs = jax.nn.softmax(lg, axis=-1).mean(axis=0)
    code_ppl = jnp.exp(-jnp.sum(hard_probs * jnp.log(hard_probs + 1e-7), -1)).sum()
    prob_ppl = jnp.exp(-jnp.sum(avg_probs * jnp.log(avg_probs + 1e-7), -1)).sum()
    sel = jnp.einsum("ngv,gvd->ngd", hard,
                     code_vars.reshape(groups, num_vars, var_dim).astype(jnp.float32))
    return sel.reshape(bsz, tsz, vq_dim), code_ppl, prob_ppl


if __name__ == "__main__":
    # Small shapes consistent with the module.
    bsz, tsz = 2, 8
    input_dim = 32
    num_vars = 16
    groups = 2
    vq_dim = 16
    var_dim = vq_dim // groups
    temp_tuple = (2.0, 0.25, 0.999995)
    curr_temp = temp_tuple[0]

    key = jax.random.PRNGKey(0)
    k_x, k_vars, k_w = jax.random.split(key, 3)

    # Deterministic parameter init mirroring __init__:
    #   vars ~ U(0,1)  shape (1, groups*num_vars, var_dim)
    #   weight_proj.weight ~ N(0,1) shape (groups*num_vars, input_dim); bias = 0
    code_vars = jax.random.uniform(k_vars, (1, groups * num_vars, var_dim),
                                   dtype=jnp.float32)
    w = jax.random.normal(k_w, (groups * num_vars, input_dim), dtype=jnp.float32)
    weight_t = w.T                                   # (input_dim, groups*num_vars)
    bias = jnp.zeros((groups * num_vars,), dtype=jnp.float32)

    x = jax.random.uniform(k_x, (bsz, tsz, input_dim), dtype=jnp.float32)

    result = gumbel_vq_forward(x, weight_t, bias, code_vars,
                               groups=groups, num_vars=num_vars,
                               vq_dim=vq_dim, curr_temp=curr_temp)
    jax.block_until_ready(result["x"])

    # Reference gets the same bf16-rounded projection operands the kernel feeds
    # the MXU (codebook stays f32: kernel's hi/lo split is ~f32-exact), so only
    # accumulation order and the approx reciprocal differ.
    ref_x, ref_cppl, ref_pppl = _reference_forward(
        x.astype(jnp.bfloat16), weight_t.astype(jnp.bfloat16),
        bias, code_vars, groups, num_vars, vq_dim)

    assert result["x"].shape == (bsz, tsz, vq_dim)
    np.testing.assert_allclose(np.asarray(result["x"]), np.asarray(ref_x),
                               rtol=1e-5, atol=1e-5)
    np.testing.assert_allclose(float(result["code_perplexity"]),
                               float(ref_cppl), rtol=1e-4)
    np.testing.assert_allclose(float(result["prob_perplex"]),
                               float(ref_pppl), rtol=2e-3)

    print("KERNEL_OK")
</pallas_src>

<mosaic_0001>
module attributes {stable_mosaic.version = 11 : i64} {
  func.func @_vq_kernel(%arg0: i32, %arg1: memref<16x32xf32, #tpu.memory_space<vmem>>, %arg2: memref<32x256xbf16, #tpu.memory_space<vmem>>, %arg3: memref<1x256xf32, #tpu.memory_space<vmem>>, %arg4: memref<256x16xbf16, #tpu.memory_space<vmem>>, %arg5: memref<256x16xbf16, #tpu.memory_space<vmem>>, %arg6: memref<16x16xf32, #tpu.memory_space<vmem>>, %arg7: memref<8x256xf32, #tpu.memory_space<vmem>>, %arg8: memref<8x256xf32, #tpu.memory_space<vmem>>) attributes {dimension_semantics = [#tpu.dimension_semantics<parallel>], iteration_bounds = array<i64: 1>, scalar_prefetch = 0 : i64, scratch_operands = 0 : i64, tpu.core_type = #tpu.core_type<tc>, window_params = [{transform_indices = @transform_0, window_bounds = array<i64: 16, 32>}, {pipeline_mode = #tpu.pipeline_mode<synchronous>, transform_indices = @transform_1, window_bounds = array<i64: 32, 256>}, {pipeline_mode = #tpu.pipeline_mode<synchronous>, transform_indices = @transform_2, window_bounds = array<i64: 1, 256>}, {pipeline_mode = #tpu.pipeline_mode<synchronous>, transform_indices = @transform_3, window_bounds = array<i64: 256, 16>}, {pipeline_mode = #tpu.pipeline_mode<synchronous>, transform_indices = @transform_4, window_bounds = array<i64: 256, 16>}, {transform_indices = @transform_5, window_bounds = array<i64: 16, 16>}, {transform_indices = @transform_6, window_bounds = array<i64: 8, 256>}, {transform_indices = @transform_7, window_bounds = array<i64: 8, 256>}]} {
    %c0 = arith.constant 0 : index
    %c0_0 = arith.constant 0 : index
    %0 = vector.load %arg1[%c0, %c0_0] : memref<16x32xf32, #tpu.memory_space<vmem>>, vector<16x32xf32>
    %1 = arith.truncf %0 : vector<16x32xf32> to vector<16x32xbf16>
    %c0_1 = arith.constant 0 : index
    %c0_2 = arith.constant 0 : index
    %2 = vector.load %arg2[%c0_1, %c0_2] : memref<32x256xbf16, #tpu.memory_space<vmem>>, vector<32x256xbf16>
    %cst = arith.constant dense<0.000000e+00> : vector<16x256xf32>
    %3 = tpu.matmul %1, %2, %cst {dimension_numbers = #tpu.dot_dimension_numbers<[1], [0], [0], [1], [0, 0, 1, 1], [], []>} : vector<16x32xbf16>, vector<32x256xbf16>, vector<16x256xf32> -> vector<16x256xf32>
    %c0_3 = arith.constant 0 : index
    %c0_4 = arith.constant 0 : index
    %4 = vector.load %arg3[%c0_3, %c0_4] : memref<1x256xf32, #tpu.memory_space<vmem>>, vector<1x256xf32>
    %5 = vector.broadcast %4 : vector<1x256xf32> to vector<16x256xf32>
    %6 = arith.addf %3, %5 : vector<16x256xf32>
    %7 = tpu.iota {dimensions = array<i32: 1>} : vector<1x128xi32>
    %cst_5 = arith.constant 0.000000e+00 : f32
    %8 = vector.broadcast %cst_5 : f32 to vector<16x16xf32>
    %9 = vector.extract_strided_slice %6 {offsets = [0, 0], sizes = [16, 128], strides = [1, 1]} : vector<16x256xf32> to vector<16x128xf32>
    %cst_6 = arith.constant dense<0xFF800000> : vector<16xf32>
    %10 = vector.multi_reduction <maximumf>, %9, %cst_6 [1] : vector<16x128xf32> to vector<16xf32>
    %11 = vector.shape_cast %10 : vector<16xf32> to vector<16x1xf32>
    %12 = vector.broadcast %11 : vector<16x1xf32> to vector<16x128xf32>
    %13 = arith.cmpf oeq, %9, %12 : vector<16x128xf32>
    %c128_i32 = arith.constant 128 : i32
    %14 = vector.shape_cast %7 : vector<1x128xi32> to vector<1x128xi32>
    %15 = vector.broadcast %14 : vector<1x128xi32> to vector<16x128xi32>
    %16 = vector.broadcast %c128_i32 : i32 to vector<16x128xi32>
    %17 = arith.select %13, %15, %16 : vector<16x128xi1>, vector<16x128xi32>
    %cst_7 = arith.constant dense<2147483647> : vector<16xi32>
    %18 = vector.multi_reduction <minsi>, %17, %cst_7 [1] : vector<16x128xi32> to vector<16xi32>
    %19 = vector.shape_cast %18 : vector<16xi32> to vector<16x1xi32>
    %20 = vector.broadcast %7 : vector<1x128xi32> to vector<16x128xi32>
    %21 = vector.broadcast %19 : vector<16x1xi32> to vector<16x128xi32>
    %22 = arith.cmpi eq, %20, %21 : vector<16x128xi32>
    %23 = arith.extui %22 : vector<16x128xi1> to vector<16x128xi32>
    %24 = arith.sitofp %23 : vector<16x128xi32> to vector<16x128xf32>
    %25 = vector.broadcast %11 : vector<16x1xf32> to vector<16x128xf32>
    %26 = arith.subf %9, %25 : vector<16x128xf32>
    %27 = math.exp %26 : vector<16x128xf32>
    %cst_8 = arith.constant dense<0.000000e+00> : vector<16xf32>
    %28 = vector.multi_reduction <add>, %27, %cst_8 [1] : vector<16x128xf32> to vector<16xf32>
    %29 = vector.shape_cast %28 : vector<16xf32> to vector<16x1xf32>
    %30 = tpu.reciprocal %29 {approx = true} : vector<16x1xf32> -> vector<16x1xf32>
    %31 = vector.broadcast %30 : vector<16x1xf32> to vector<16x128xf32>
    %32 = arith.mulf %27, %31 : vector<16x128xf32>
    %cst_9 = arith.constant dense<0.000000e+00> : vector<128xf32>
    %33 = vector.multi_reduction <add>, %24, %cst_9 [0] : vector<16x128xf32> to vector<128xf32>
    %34 = vector.shape_cast %33 : vector<128xf32> to vector<1x128xf32>
    %35 = vector.shape_cast %34 : vector<1x128xf32> to vector<1x128xf32>
    %36 = vector.broadcast %35 : vector<1x128xf32> to vector<8x128xf32>
    %c0_10 = arith.constant 0 : index
    %c0_11 = arith.constant 0 : index
    %37 = vector.load %arg7[%c0_10, %c0_11] : memref<8x256xf32, #tpu.memory_space<vmem>>, vector<8x128xf32>
    tpu.vector_store %arg7[%c0_10, %c0_11], %36 {strides = array<i32>} : memref<8x256xf32, #tpu.memory_space<vmem>>, vector<8x128xf32>,
    %cst_12 = arith.constant dense<0.000000e+00> : vector<128xf32>
    %38 = vector.multi_reduction <add>, %32, %cst_12 [0] : vector<16x128xf32> to vector<128xf32>
    %39 = vector.shape_cast %38 : vector<128xf32> to vector<1x128xf32>
    %40 = vector.shape_cast %39 : vector<1x128xf32> to vector<1x128xf32>
    %41 = vector.broadcast %40 : vector<1x128xf32> to vector<8x128xf32>
    %c0_13 = arith.constant 0 : index
    %c0_14 = arith.constant 0 : index
    %42 = vector.load %arg8[%c0_13, %c0_14] : memref<8x256xf32, #tpu.memory_space<vmem>>, vector<8x128xf32>
    tpu.vector_store %arg8[%c0_13, %c0_14], %41 {strides = array<i32>} : memref<8x256xf32, #tpu.memory_space<vmem>>, vector<8x128xf32>,
    %43 = arith.truncf %24 : vector<16x128xf32> to vector<16x128xbf16>
    %c0_15 = arith.constant 0 : index
    %c0_16 = arith.constant 0 : index
    %44 = vector.load %arg4[%c0_15, %c0_16] : memref<256x16xbf16, #tpu.memory_space<vmem>>, vector<128x16xbf16>
    %cst_17 = arith.constant dense<0.000000e+00> : vector<16x16xf32>
    %45 = tpu.matmul %43, %44, %cst_17 {dimension_numbers = #tpu.dot_dimension_numbers<[1], [0], [0], [1], [0, 0, 1, 1], [], []>} : vector<16x128xbf16>, vector<128x16xbf16>, vector<16x16xf32> -> vector<16x16xf32>
    %46 = arith.addf %8, %45 : vector<16x16xf32>
    %c0_18 = arith.constant 0 : index
    %c0_19 = arith.constant 0 : index
    %47 = vector.load %arg5[%c0_18, %c0_19] : memref<256x16xbf16, #tpu.memory_space<vmem>>, vector<128x16xbf16>
    %cst_20 = arith.constant dense<0.000000e+00> : vector<16x16xf32>
    %48 = tpu.matmul %43, %47, %cst_20 {dimension_numbers = #tpu.dot_dimension_numbers<[1], [0], [0], [1], [0, 0, 1, 1], [], []>} : vector<16x128xbf16>, vector<128x16xbf16>, vector<16x16xf32> -> vector<16x16xf32>
    %49 = arith.addf %46, %48 : vector<16x16xf32>
    %50 = vector.extract_strided_slice %6 {offsets = [0, 128], sizes = [16, 128], strides = [1, 1]} : vector<16x256xf32> to vector<16x128xf32>
    %cst_21 = arith.constant dense<0xFF800000> : vector<16xf32>
    %51 = vector.multi_reduction <maximumf>, %50, %cst_21 [1] : vector<16x128xf32> to vector<16xf32>
    %52 = vector.shape_cast %51 : vector<16xf32> to vector<16x1xf32>
    %53 = vector.broadcast %52 : vector<16x1xf32> to vector<16x128xf32>
    %54 = arith.cmpf oeq, %50, %53 : vector<16x128xf32>
    %c128_i32_22 = arith.constant 128 : i32
    %55 = vector.shape_cast %7 : vector<1x128xi32> to vector<1x128xi32>
    %56 = vector.broadcast %55 : vector<1x128xi32> to vector<16x128xi32>
    %57 = vector.broadcast %c128_i32_22 : i32 to vector<16x128xi32>
    %58 = arith.select %54, %56, %57 : vector<16x128xi1>, vector<16x128xi32>
    %cst_23 = arith.constant dense<2147483647> : vector<16xi32>
    %59 = vector.multi_reduction <minsi>, %58, %cst_23 [1] : vector<16x128xi32> to vector<16xi32>
    %60 = vector.shape_cast %59 : vector<16xi32> to vector<16x1xi32>
    %61 = vector.broadcast %7 : vector<1x128xi32> to vector<16x128xi32>
    %62 = vector.broadcast %60 : vector<16x1xi32> to vector<16x128xi32>
    %63 = arith.cmpi eq, %61, %62 : vector<16x128xi32>
    %64 = arith.extui %63 : vector<16x128xi1> to vector<16x128xi32>
    %65 = arith.sitofp %64 : vector<16x128xi32> to vector<16x128xf32>
    %66 = vector.broadcast %52 : vector<16x1xf32> to vector<16x128xf32>
    %67 = arith.subf %50, %66 : vector<16x128xf32>
    %68 = math.exp %67 : vector<16x128xf32>
    %cst_24 = arith.constant dense<0.000000e+00> : vector<16xf32>
    %69 = vector.multi_reduction <add>, %68, %cst_24 [1] : vector<16x128xf32> to vector<16xf32>
    %70 = vector.shape_cast %69 : vector<16xf32> to vector<16x1xf32>
    %71 = tpu.reciprocal %70 {approx = true} : vector<16x1xf32> -> vector<16x1xf32>
    %72 = vector.broadcast %71 : vector<16x1xf32> to vector<16x128xf32>
    %73 = arith.mulf %68, %72 : vector<16x128xf32>
    %cst_25 = arith.constant dense<0.000000e+00> : vector<128xf32>
    %74 = vector.multi_reduction <add>, %65, %cst_25 [0] : vector<16x128xf32> to vector<128xf32>
    %75 = vector.shape_cast %74 : vector<128xf32> to vector<1x128xf32>
    %76 = vector.shape_cast %75 : vector<1x128xf32> to vector<1x128xf32>
    %77 = vector.broadcast %76 : vector<1x128xf32> to vector<8x128xf32>
    %c0_26 = arith.constant 0 : index
    %c128 = arith.constant 128 : index
    %78 = vector.load %arg7[%c0_26, %c128] : memref<8x256xf32, #tpu.memory_space<vmem>>, vector<8x128xf32>
    tpu.vector_store %arg7[%c0_26, %c128], %77 {strides = array<i32>} : memref<8x256xf32, #tpu.memory_space<vmem>>, vector<8x128xf32>,
    %cst_27 = arith.constant dense<0.000000e+00> : vector<128xf32>
    %79 = vector.multi_reduction <add>, %73, %cst_27 [0] : vector<16x128xf32> to vector<128xf32>
    %80 = vector.shape_cast %79 : vector<128xf32> to vector<1x128xf32>
    %81 = vector.shape_cast %80 : vector<1x128xf32> to vector<1x128xf32>
    %82 = vector.broadcast %81 : vector<1x128xf32> to vector<8x128xf32>
    %c0_28 = arith.constant 0 : index
    %c128_29 = arith.constant 128 : index
    %83 = vector.load %arg8[%c0_28, %c128_29] : memref<8x256xf32, #tpu.memory_space<vmem>>, vector<8x128xf32>
    tpu.vector_store %arg8[%c0_28, %c128_29], %82 {strides = array<i32>} : memref<8x256xf32, #tpu.memory_space<vmem>>, vector<8x128xf32>,
    %84 = arith.truncf %65 : vector<16x128xf32> to vector<16x128xbf16>
    %c128_30 = arith.constant 128 : index
    %c0_31 = arith.constant 0 : index
    %85 = vector.load %arg4[%c128_30, %c0_31] : memref<256x16xbf16, #tpu.memory_space<vmem>>, vector<128x16xbf16>
    %cst_32 = arith.constant dense<0.000000e+00> : vector<16x16xf32>
    %86 = tpu.matmul %84, %85, %cst_32 {dimension_numbers = #tpu.dot_dimension_numbers<[1], [0], [0], [1], [0, 0, 1, 1], [], []>} : vector<16x128xbf16>, vector<128x16xbf16>, vector<16x16xf32> -> vector<16x16xf32>
    %87 = arith.addf %49, %86 : vector<16x16xf32>
    %c128_33 = arith.constant 128 : index
    %c0_34 = arith.constant 0 : index
    %88 = vector.load %arg5[%c128_33, %c0_34] : memref<256x16xbf16, #tpu.memory_space<vmem>>, vector<128x16xbf16>
    %cst_35 = arith.constant dense<0.000000e+00> : vector<16x16xf32>
    %89 = tpu.matmul %84, %88, %cst_35 {dimension_numbers = #tpu.dot_dimension_numbers<[1], [0], [0], [1], [0, 0, 1, 1], [], []>} : vector<16x128xbf16>, vector<128x16xbf16>, vector<16x16xf32> -> vector<16x16xf32>
    %90 = arith.addf %87, %89 : vector<16x16xf32>
    %c0_36 = arith.constant 0 : index
    %c0_37 = arith.constant 0 : index
    %91 = vector.load %arg6[%c0_36, %c0_37] : memref<16x16xf32, #tpu.memory_space<vmem>>, vector<16x16xf32>
    tpu.vector_store %arg6[%c0_36, %c0_37], %90 {strides = array<i32>} : memref<16x16xf32, #tpu.memory_space<vmem>>, vector<16x16xf32>,
    return
  }
  func.func @transform_0(%arg0: i32) -> (i32, i32) {
    %c0_i32 = arith.constant 0 : i32
    %c0_i32_0 = arith.constant 0 : i32
    return %arg0, %c0_i32 : i32, i32
  }
  func.func @transform_1(%arg0: i32) -> (i32, i32) {
    %c0_i32 = arith.constant 0 : i32
    %c0_i32_0 = arith.constant 0 : i32
    %c0_i32_1 = arith.constant 0 : i32
    return %c0_i32, %c0_i32_0 : i32, i32
  }
  func.func @transform_2(%arg0: i32) -> (i32, i32) {
    %c0_i32 = arith.constant 0 : i32
    %c0_i32_0 = arith.constant 0 : i32
    %c0_i32_1 = arith.constant 0 : i32
    return %c0_i32, %c0_i32_0 : i32, i32
  }
  func.func @transform_3(%arg0: i32) -> (i32, i32) {
    %c0_i32 = arith.constant 0 : i32
    %c0_i32_0 = arith.constant 0 : i32
    %c0_i32_1 = arith.constant 0 : i32
    return %c0_i32, %c0_i32_0 : i32, i32
  }
  func.func @transform_4(%arg0: i32) -> (i32, i32) {
    %c0_i32 = arith.constant 0 : i32
    %c0_i32_0 = arith.constant 0 : i32
    %c0_i32_1 = arith.constant 0 : i32
    return %c0_i32, %c0_i32_0 : i32, i32
  }
  func.func @transform_5(%arg0: i32) -> (i32, i32) {
    %c0_i32 = arith.constant 0 : i32
    %c0_i32_0 = arith.constant 0 : i32
    return %arg0, %c0_i32 : i32, i32
  }
  func.func @transform_6(%arg0: i32) -> (i32, i32) {
    %c0_i32 = arith.constant 0 : i32
    %c0_i32_0 = arith.constant 0 : i32
    return %arg0, %c0_i32 : i32, i32
  }
  func.func @transform_7(%arg0: i32) -> (i32, i32) {
    %c0_i32 = arith.constant 0 : i32
    %c0_i32_0 = arith.constant 0 : i32
    return %arg0, %c0_i32 : i32, i32
  }
}

</mosaic_0001>

<llo_original>
// kernel: tpu_custom_call.1
$region0: #{tpu_custom_call.1}
  #allocation0 [shape = 'u32[]', space=smem, size = 0x4, offset = 0x4, fixed_abs, tag = 'smem constant byte address 0x4 - core index']
  #allocation1 [shape = 'u32[144,128]{1,0:T(1,128)}', space=vmem, size = 0x12000, scoped, tag = 'internal scratch']
  %s0 = inlined_call_operand.vmem [shape: f32[16,32], index: 0, kind: input, shape index: {}]
  %s1 = inlined_call_operand.vmem [shape: bf16[32,256], index: 1, kind: input, shape index: {}]
  %s2 = inlined_call_operand.vmem [shape: f32[1,256], index: 2, kind: input, shape index: {}]
  %s3 = inlined_call_operand.vmem [shape: bf16[256,16], index: 3, kind: input, shape index: {}]
  %s4 = inlined_call_operand.vmem [shape: bf16[256,16], index: 4, kind: input, shape index: {}]
  %s5 = inlined_call_operand.hbm [shape: f32[16,16], index: 5, kind: output, shape index: {0}]
  %s6 = inlined_call_operand.hbm [shape: f32[8,256], index: 6, kind: output, shape index: {1}]
  %s7 = inlined_call_operand.hbm [shape: f32[8,256], index: 7, kind: output, shape index: {2}]
  %8 = xla_tuple %s5, %s6, %s7
  %s9 = sld [smem:[#allocation0]]
  $region46: #{tpu_custom_call.1} parent=0
    _
  %s11 = ssub.s32 1, %s9
  %s12 = scalar_select 0, %s11, %s9
  $region1: #{tpu_custom_call.1} parent=0
    #allocation2 [shape = 'u8[8192]{0}', space=vmem, size = 0x2000, scoped, tag = 'output window, operand 0, single buffered']
    #allocation3 [shape = 's32[1]{0}', space=sflag, size = 0x4, scoped, tag = 'scoped memory for tpu_custom_call.1']
    #allocation4 [shape = 'u8[8192]{0}', space=vmem, size = 0x2000, scoped, tag = 'output window, operand 1, single buffered']
    #allocation5 [shape = 's32[1]{0}', space=sflag, size = 0x4, scoped, tag = 'scoped memory for tpu_custom_call.1']
    #allocation6 [shape = 'u8[8192]{0}', space=vmem, size = 0x2000, scoped, tag = 'output window, operand 2, single buffered']
    %13 = vsyncpa [#allocation3], 0
    %14 = vsyncpa [#allocation5], 0
    // Predicated region
    $region2: #{tpu_custom_call.1} parent=1 // pred_check
      _
    $region3: #{tpu_custom_call.1} parent=1 // pred_check_branch
      %16 = sbr.rel (0) target = $region5
    $region4: #{tpu_custom_call.1} parent=1 // pred_region
      _
    $region5: #{tpu_custom_call.1} parent=1 // pred_fallthru
      _
    // Predicated region
    $region6: #{tpu_custom_call.1} parent=1 // pred_check
      _
    $region7: #{tpu_custom_call.1} parent=1 // pred_check_branch
      %18 = sbr.rel (0) target = $region9
    $region8: #{tpu_custom_call.1} parent=1 // pred_region
      _
    $region9: #{tpu_custom_call.1} parent=1 // pred_fallthru
      _
    // Predicated region
    $region10: #{tpu_custom_call.1} parent=1 // pred_check
      _
    $region11: #{tpu_custom_call.1} parent=1 // pred_check_branch
      %20 = sbr.rel (0) target = $region13
    $region12: #{tpu_custom_call.1} parent=1 // pred_region
      _
    $region13: #{tpu_custom_call.1} parent=1 // pred_fallthru
      _
    // Predicated region
    $region14: #{tpu_custom_call.1} parent=1 // pred_check
      _
    $region15: #{tpu_custom_call.1} parent=1 // pred_check_branch
      %22 = sbr.rel (0) target = $region17
    $region16: #{tpu_custom_call.1} parent=1 // pred_region
      _
    $region17: #{tpu_custom_call.1} parent=1 // pred_fallthru
      _
    // Predicated region
    $region18: #{tpu_custom_call.1} parent=1 // pred_check
      _
    $region19: #{tpu_custom_call.1} parent=1 // pred_check_branch
      %24 = sbr.rel (0) target = $region21
    $region20: #{tpu_custom_call.1} parent=1 // pred_region
      _
    $region21: #{tpu_custom_call.1} parent=1 // pred_fallthru
      _
    %v26 = vld [vmem:[%s0] sm:$0xff]
    %v27 = vld [vmem:[%s0 + $0x8] sm:$0xff]
    %v28 = vpack.c.bf16 %v27, %v26
    %v29 = vld [vmem:[%s1] sm:$0xff]
    %v30 = vld [vmem:[%s1 + $0x8] sm:$0xff]
    %v31 = vld [vmem:[%s1 + $0x10] sm:$0xff]
    %v32 = vld [vmem:[%s1 + $0x18] sm:$0xff]
    %v33 = vld [vmem:[%s2] sm:$0x3]
    %v35 = vlaneseq
    %v36 = vshrl.u32 %v35, 7
    %v37 = vsub.s32 0, %v36
    %v38 = vrot.slane %v33, %v37
    %v39 = vlaneseq
    %v40 = vshrl.u32 %v39, 7
    %v41 = vsub.s32 1, %v40
    %v42 = vrot.slane %v33, %v41
    %v49 = vunpack.c.l.b16 %v29
    %v50 = vunpack.c.h.b16 %v29
    %v51 = vunpack.c.l.b16 %v30
    %v52 = vunpack.c.h.b16 %v30
    %v53 = vunpack.c.l.b16 %v31
    %v54 = vunpack.c.h.b16 %v31
    %v55 = vunpack.c.l.b16 %v32
    %v56 = vunpack.c.h.b16 %v32
    %v57 = vpack.c.b16 %v51, %v49
    %v58 = vpack.c.b16 %v52, %v50
    %v59 = vpack.c.b16 %v55, %v53
    %v60 = vpack.c.b16 %v56, %v54
    %vm65 = vcmask 261120
    %v67 = vsel %vm65, %v28, 0
    %69 = vmatprep.subr.bf16.mxu0 %v58
    %70 = vmatpush1.bf16.msra.mxu0 %v57
    %71 = vmatprep.subr.bf16.mxu0 %v60
    %72 = vmatpush1.bf16.msra.mxu0 %v59
    %73 = vmatprep.subr.bf16.mxu0 0
    %74 = vmatpush1.bf16.msra.mxu0 0
    %75 = vmatprep.subr.bf16.mxu0 0
    %76 = vmatpush1.bf16.msra.mxu0 0
    %77 = vmatprep.subr.bf16.mxu0 0
    %78 = vmatpush1.bf16.msra.mxu0 0
    %79 = vmatprep.subr.bf16.mxu0 0
    %80 = vmatpush1.bf16.msra.mxu0 0
    %81 = vmatprep.subr.bf16.mxu0 0
    %82 = vmatpush1.bf16.msra.mxu0 0
    %83 = vmatprep.subr.bf16.mxu0 0
    %84 = vmatpush1.bf16.msra.mxu0 0
    %85 = vmatprep.subr.bf16.mxu0 0
    %86 = vmatpush1.bf16.msra.mxu0 0
    %87 = vmatprep.subr.bf16.mxu0 0
    %88 = vmatpush1.bf16.msra.mxu0 0
    %89 = vmatprep.subr.bf16.mxu0 0
    %90 = vmatpush1.bf16.msra.mxu0 0
    %91 = vmatprep.subr.bf16.mxu0 0
    %92 = vmatpush1.bf16.msra.mxu0 0
    %93 = vmatprep.subr.bf16.mxu0 0
    %94 = vmatpush1.bf16.msra.mxu0 0
    %95 = vmatprep.subr.bf16.mxu0 0
    %96 = vmatpush1.bf16.msra.mxu0 0
    %97 = vmatprep.subr.bf16.mxu0 0
    %98 = vmatpush1.bf16.msra.mxu0 0
    %99 = vmatprep.subr.bf16.mxu0 0
    %100 = vmatpush1.bf16.msra.mxu0 0
    %101 = vmatprep.mubr.bf16.mxu0 0
    %102 = vmatmul.mubr.bf16.gmra.mrb[0].mxu0 %v67
    %v103 = vpop.f32.mrb[0].mxu0
    %v104 = vadd.f32 %v38, %v103
    %v105 = vpop.f32.mrb[0].mxu0
    %v106 = vadd.f32 %v42, %v105
    %v107 = vpop.f32.mrb[0].mxu0
    %v108 = vadd.f32 %v38, %v107
    %v109 = vpop.f32.mrb[0].mxu0
    %v110 = vadd.f32 %v42, %v109
    %111 = vdwg.mxu0
    %v112 = vlaneseq
    %v113 = vand.u32 %v112, 127
    %114 = vmax.xlane.f32.xlu0 %v104
    %v115 = vpop.xlane.xlu0 %114
    %116 = vmax.xlane.f32.xlu0 %v108
    %v117 = vpop.xlane.xlu0 %116
    %vm118 = vcmp.eq.f32.partialorder %v104, %v115
    %vm119 = vcmp.eq.f32.partialorder %v108, %v117
    %v120 = vsel %vm118, %v113, 128
    %v121 = vsel %vm119, %v113, 128
    %v122 = vand.u32 %v120, 65535
    %v123 = vshra.s32 %v120, 16
    %v124 = vcvt.s32.f32 %v122
    %v125 = vcvt.s32.f32 %v123
    %126 = vmin.xlane.f32.xlu0 %v125
    %v127 = vpop.xlane.xlu0 %126
    %vm128 = vcmp.eq.f32.partialorder %v125, %v127
    %v129 = vsel %vm128, %v124, inf
    %130 = vmin.xlane.f32.xlu0 %v129
    %v131 = vpop.xlane.xlu0 %130
    %v132 = vcvt.f32.s32 %v131
    %v133 = vcvt.f32.s32 %v127
    %v134 = vshll.u32 %v133, 16
    %v135 = vadd.s32 %v134, %v132
    %v136 = vand.u32 %v121, 65535
    %v137 = vshra.s32 %v121, 16
    %v138 = vcvt.s32.f32 %v136
    %v139 = vcvt.s32.f32 %v137
    %140 = vmin.xlane.f32.xlu0 %v139
    %v141 = vpop.xlane.xlu0 %140
    %vm142 = vcmp.eq.f32.partialorder %v139, %v141
    %v143 = vsel %vm142, %v138, inf
    %144 = vmin.xlane.f32.xlu0 %v143
    %v145 = vpop.xlane.xlu0 %144
    %v146 = vcvt.f32.s32 %v145
    %v147 = vcvt.f32.s32 %v141
    %v148 = vshll.u32 %v147, 16
    %v149 = vadd.s32 %v148, %v146
    %vm150 = vcmp.eq.s32.totalorder %v113, %v135
    %vm151 = vcmp.eq.s32.totalorder %v113, %v149
    %v152 = vsel %vm150, 1, 0
    %v153 = vsel %vm151, 1, 0
    %v154 = vcvt.s32.f32 %v152
    %v155 = vcvt.s32.f32 %v153
    %v156 = vsub.f32 %v104, %v115
    %v157 = vsub.f32 %v108, %v117
    %v158 = vmul.f32 %v156, 1.442695
    %v159 = vpow.pop %v158
    %v160 = vmul.f32 %v157, 1.442695
    %v161 = vpow.pop %v160
    %162 = vadd.xlane.f32.xlu0 %v159
    %v163 = vpop.xlane.xlu0 %162
    %164 = vadd.xlane.f32.xlu0 %v161
    %v165 = vpop.xlane.xlu0 %164
    %v166 = vrcp.pop %v163
    %v167 = vrcp.pop %v165
    %v168 = vmul.f32 %v159, %v166
    %v169 = vmul.f32 %v161, %v167
    %v170 = vadd.f32 %v154, %v155
    %v171 = vrot.slane %v170, 4
    %v172 = vadd.f32 %v170, %v171
    %v173 = vrot.slane %v172, 2
    %v174 = vadd.f32 %v172, %v173
    %v175 = vrot.slane %v174, 1
    %v176 = vadd.f32 %v174, %v175
    %177 = vst [vmem:[#allocation4] sm:$0xff] %v176
    %v178 = vadd.f32 %v168, %v169
    %v179 = vrot.slane %v178, 4
    %v180 = vadd.f32 %v178, %v179
    %v181 = vrot.slane %v180, 2
    %v182 = vadd.f32 %v180, %v181
    %v183 = vrot.slane %v182, 1
    %v184 = vadd.f32 %v182, %v183
    %185 = vst [vmem:[#allocation6] sm:$0xff] %v184
    %v186 = vpack.c.bf16 %v155, %v154
    %v187 = vld [vmem:[%s3] sm:$0xf]
    %v188 = vld [vmem:[%s3 + $0x4] sm:$0xf]
    %v189 = vld [vmem:[%s3 + $0x8] sm:$0xf]
    %v190 = vld [vmem:[%s3 + $0xc] sm:$0xf]
    %v191 = vld [vmem:[%s3 + $0x10] sm:$0xf]
    %v192 = vld [vmem:[%s3 + $0x14] sm:$0xf]
    %v193 = vld [vmem:[%s3 + $0x18] sm:$0xf]
    %v194 = vld [vmem:[%s3 + $0x1c] sm:$0xf]
    %v195 = vld [vmem:[%s3 + $0x20] sm:$0xf]
    %v196 = vld [vmem:[%s3 + $0x24] sm:$0xf]
    %v197 = vld [vmem:[%s3 + $0x28] sm:$0xf]
    %v198 = vld [vmem:[%s3 + $0x2c] sm:$0xf]
    %v199 = vld [vmem:[%s3 + $0x30] sm:$0xf]
    %v200 = vld [vmem:[%s3 + $0x34] sm:$0xf]
    %v201 = vld [vmem:[%s3 + $0x38] sm:$0xf]
    %v202 = vld [vmem:[%s3 + $0x3c] sm:$0xf]
    %v203 = vld [vmem:[%s4] sm:$0xf]
    %v204 = vld [vmem:[%s4 + $0x4] sm:$0xf]
    %v205 = vld [vmem:[%s4 + $0x8] sm:$0xf]
    %v206 = vld [vmem:[%s4 + $0xc] sm:$0xf]
    %v207 = vld [vmem:[%s4 + $0x10] sm:$0xf]
    %v208 = vld [vmem:[%s4 + $0x14] sm:$0xf]
    %v209 = vld [vmem:[%s4 + $0x18] sm:$0xf]
    %v210 = vld [vmem:[%s4 + $0x1c] sm:$0xf]
    %v211 = vld [vmem:[%s4 + $0x20] sm:$0xf]
    %v212 = vld [vmem:[%s4 + $0x24] sm:$0xf]
    %v213 = vld [vmem:[%s4 + $0x28] sm:$0xf]
    %v214 = vld [vmem:[%s4 + $0x2c] sm:$0xf]
    %v215 = vld [vmem:[%s4 + $0x30] sm:$0xf]
    %v216 = vld [vmem:[%s4 + $0x34] sm:$0xf]
    %v217 = vld [vmem:[%s4 + $0x38] sm:$0xf]
    %v218 = vld [vmem:[%s4 + $0x3c] sm:$0xf]
    %v235 = vunpack.c.l.b16 %v203
    %v236 = vunpack.c.l.b16 %v204
    %v237 = vunpack.c.l.b16 %v205
    %v238 = vunpack.c.l.b16 %v206
    %v239 = vunpack.c.l.b16 %v207
    %v240 = vunpack.c.l.b16 %v208
    %v241 = vunpack.c.l.b16 %v209
    %v242 = vunpack.c.l.b16 %v210
    %v243 = vunpack.c.l.b16 %v211
    %v244 = vunpack.c.l.b16 %v212
    %v245 = vunpack.c.l.b16 %v213
    %v246 = vunpack.c.l.b16 %v214
    %v247 = vunpack.c.l.b16 %v215
    %v248 = vunpack.c.l.b16 %v216
    %v249 = vunpack.c.l.b16 %v217
    %v250 = vunpack.c.l.b16 %v218
    %v251 = vpack.c.b16 %v236, %v235
    %v252 = vpack.c.b16 %v238, %v237
    %v253 = vpack.c.b16 %v240, %v239
    %v254 = vpack.c.b16 %v242, %v241
    %v255 = vpack.c.b16 %v244, %v243
    %v256 = vpack.c.b16 %v246, %v245
    %v257 = vpack.c.b16 %v248, %v247
    %v258 = vpack.c.b16 %v250, %v249
    %267 = vmatprep.subr.bf16.mxu0 0
    %268 = vmatpush1.bf16.msra.mxu0 %v251
    %269 = vmatprep.subr.bf16.mxu0 0
    %270 = vmatpush1.bf16.msra.mxu0 %v252
    %271 = vmatprep.subr.bf16.mxu0 0
    %272 = vmatpush1.bf16.msra.mxu0 %v253
    %273 = vmatprep.subr.bf16.mxu0 0
    %274 = vmatpush1.bf16.msra.mxu0 %v254
    %275 = vmatprep.subr.bf16.mxu0 0
    %276 = vmatpush1.bf16.msra.mxu0 %v255
    %277 = vmatprep.subr.bf16.mxu0 0
    %278 = vmatpush1.bf16.msra.mxu0 %v256
    %279 = vmatprep.subr.bf16.mxu0 0
    %280 = vmatpush1.bf16.msra.mxu0 %v257
    %281 = vmatprep.subr.bf16.mxu0 0
    %282 = vmatpush1.bf16.msra.mxu0 %v258
    %283 = vmatprep.subr.bf16.mxu0 0
    %284 = vmatpush1.bf16.msra.mxu0 0
    %285 = vmatprep.subr.bf16.mxu0 0
    %286 = vmatpush1.bf16.msra.mxu0 0
    %287 = vmatprep.subr.bf16.mxu0 0
    %288 = vmatpush1.bf16.msra.mxu0 0
    %289 = vmatprep.subr.bf16.mxu0 0
    %290 = vmatpush1.bf16.msra.mxu0 0
    %291 = vmatprep.subr.bf16.mxu0 0
    %292 = vmatpush1.bf16.msra.mxu0 0
    %293 = vmatprep.subr.bf16.mxu0 0
    %294 = vmatpush1.bf16.msra.mxu0 0
    %295 = vmatprep.subr.bf16.mxu0 0
    %296 = vmatpush1.bf16.msra.mxu0 0
    %297 = vmatprep.subr.bf16.mxu0 0
    %298 = vmatpush1.bf16.msra.mxu0 0
    %299 = vmatprep.mubr.bf16.mxu0 0
    %300 = vmatmul.mubr.bf16.gmra.mrb[0].mxu0 %v186
    %v301 = vpop.f32.mrb[0].mxu0
    %v302 = vadd.f32 0.0, %v301
    %v303 = vpop.f32.mrb[0].mxu0
    %v304 = vpop.f32.mrb[0].mxu0
    %v305 = vadd.f32 0.0, %v304
    %v306 = vpop.f32.mrb[0].mxu0
    %307 = vdwg.mxu0
    %v324 = vunpack.c.l.b16 %v187
    %v325 = vunpack.c.l.b16 %v188
    %v326 = vunpack.c.l.b16 %v189
    %v327 = vunpack.c.l.b16 %v190
    %v328 = vunpack.c.l.b16 %v191
    %v329 = vunpack.c.l.b16 %v192
    %v330 = vunpack.c.l.b16 %v193
    %v331 = vunpack.c.l.b16 %v194
    %v332 = vunpack.c.l.b16 %v195
    %v333 = vunpack.c.l.b16 %v196
    %v334 = vunpack.c.l.b16 %v197
    %v335 = vunpack.c.l.b16 %v198
    %v336 = vunpack.c.l.b16 %v199
    %v337 = vunpack.c.l.b16 %v200
    %v338 = vunpack.c.l.b16 %v201
    %v339 = vunpack.c.l.b16 %v202
    %v340 = vpack.c.b16 %v325, %v324
    %v341 = vpack.c.b16 %v327, %v326
    %v342 = vpack.c.b16 %v329, %v328
    %v343 = vpack.c.b16 %v331, %v330
    %v344 = vpack.c.b16 %v333, %v332
    %v345 = vpack.c.b16 %v335, %v334
    %v346 = vpack.c.b16 %v337, %v336
    %v347 = vpack.c.b16 %v339, %v338
    %356 = vmatprep.subr.bf16.mxu0 0
    %357 = vmatpush1.bf16.msra.mxu0 %v340
    %358 = vmatprep.subr.bf16.mxu0 0
    %359 = vmatpush1.bf16.msra.mxu0 %v341
    %360 = vmatprep.subr.bf16.mxu0 0
    %361 = vmatpush1.bf16.msra.mxu0 %v342
    %362 = vmatprep.subr.bf16.mxu0 0
    %363 = vmatpush1.bf16.msra.mxu0 %v343
    %364 = vmatprep.subr.bf16.mxu0 0
    %365 = vmatpush1.bf16.msra.mxu0 %v344
    %366 = vmatprep.subr.bf16.mxu0 0
    %367 = vmatpush1.bf16.msra.mxu0 %v345
    %368 = vmatprep.subr.bf16.mxu0 0
    %369 = vmatpush1.bf16.msra.mxu0 %v346
    %370 = vmatprep.subr.bf16.mxu0 0
    %371 = vmatpush1.bf16.msra.mxu0 %v347
    %372 = vmatprep.subr.bf16.mxu0 0
    %373 = vmatpush1.bf16.msra.mxu0 0
    %374 = vmatprep.subr.bf16.mxu0 0
    %375 = vmatpush1.bf16.msra.mxu0 0
    %376 = vmatprep.subr.bf16.mxu0 0
    %377 = vmatpush1.bf16.msra.mxu0 0
    %378 = vmatprep.subr.bf16.mxu0 0
    %379 = vmatpush1.bf16.msra.mxu0 0
    %380 = vmatprep.subr.bf16.mxu0 0
    %381 = vmatpush1.bf16.msra.mxu0 0
    %382 = vmatprep.subr.bf16.mxu0 0
    %383 = vmatpush1.bf16.msra.mxu0 0
    %384 = vmatprep.subr.bf16.mxu0 0
    %385 = vmatpush1.bf16.msra.mxu0 0
    %386 = vmatprep.subr.bf16.mxu0 0
    %387 = vmatpush1.bf16.msra.mxu0 0
    %388 = vmatprep.mubr.bf16.mxu0 0
    %389 = vmatmul.mubr.bf16.gmra.mrb[0].mxu0 %v186
    %v390 = vpop.f32.mrb[0].mxu0
    %v391 = vadd.f32 %v302, %v390
    %v392 = vpop.f32.mrb[0].mxu0
    %v393 = vpop.f32.mrb[0].mxu0
    %v394 = vadd.f32 %v305, %v393
    %v395 = vpop.f32.mrb[0].mxu0
    %396 = vdwg.mxu0
    %397 = vmax.xlane.f32.xlu0 %v106
    %v398 = vpop.xlane.xlu0 %397
    %399 = vmax.xlane.f32.xlu0 %v110
    %v400 = vpop.xlane.xlu0 %399
    %vm401 = vcmp.eq.f32.partialorder %v106, %v398
    %vm402 = vcmp.eq.f32.partialorder %v110, %v400
    %v403 = vsel %vm401, %v113, 128
    %v404 = vsel %vm402, %v113, 128
    %v405 = vand.u32 %v403, 65535
    %v406 = vshra.s32 %v403, 16
    %v407 = vcvt.s32.f32 %v405
    %v408 = vcvt.s32.f32 %v406
    %409 = vmin.xlane.f32.xlu0 %v408
    %v410 = vpop.xlane.xlu0 %409
    %vm411 = vcmp.eq.f32.partialorder %v408, %v410
    %v412 = vsel %vm411, %v407, inf
    %413 = vmin.xlane.f32.xlu0 %v412
    %v414 = vpop.xlane.xlu0 %413
    %v415 = vcvt.f32.s32 %v414
    %v416 = vcvt.f32.s32 %v410
    %v417 = vshll.u32 %v416, 16
    %v418 = vadd.s32 %v417, %v415
    %v419 = vand.u32 %v404, 65535
    %v420 = vshra.s32 %v404, 16
    %v421 = vcvt.s32.f32 %v419
    %v422 = vcvt.s32.f32 %v420
    %423 = vmin.xlane.f32.xlu0 %v422
    %v424 = vpop.xlane.xlu0 %423
    %vm425 = vcmp.eq.f32.partialorder %v422, %v424
    %v426 = vsel %vm425, %v421, inf
    %427 = vmin.xlane.f32.xlu0 %v426
    %v428 = vpop.xlane.xlu0 %427
    %v429 = vcvt.f32.s32 %v428
    %v430 = vcvt.f32.s32 %v424
    %v431 = vshll.u32 %v430, 16
    %v432 = vadd.s32 %v431, %v429
    %vm433 = vcmp.eq.s32.totalorder %v113, %v418
    %vm434 = vcmp.eq.s32.totalorder %v113, %v432
    %v435 = vsel %vm433, 1, 0
    %v436 = vsel %vm434, 1, 0
    %v437 = vcvt.s32.f32 %v435
    %v438 = vcvt.s32.f32 %v436
    %v439 = vsub.f32 %v106, %v398
    %v440 = vsub.f32 %v110, %v400
    %v441 = vmul.f32 %v439, 1.442695
    %v442 = vpow.pop %v441
    %v443 = vmul.f32 %v440, 1.442695
    %v444 = vpow.pop %v443
    %445 = vadd.xlane.f32.xlu0 %v442
    %v446 = vpop.xlane.xlu0 %445
    %447 = vadd.xlane.f32.xlu0 %v444
    %v448 = vpop.xlane.xlu0 %447
    %v449 = vrcp.pop %v446
    %v450 = vrcp.pop %v448
    %v451 = vmul.f32 %v442, %v449
    %v452 = vmul.f32 %v444, %v450
    %v453 = vadd.f32 %v437, %v438
    %v454 = vrot.slane %v453, 4
    %v455 = vadd.f32 %v453, %v454
    %v456 = vrot.slane %v455, 2
    %v457 = vadd.f32 %v455, %v456
    %v458 = vrot.slane %v457, 1
    %v459 = vadd.f32 %v457, %v458
    %460 = vst [vmem:[#allocation4 + $0x8] sm:$0xff] %v459
    %v461 = vadd.f32 %v451, %v452
    %v462 = vrot.slane %v461, 4
    %v463 = vadd.f32 %v461, %v462
    %v464 = vrot.slane %v463, 2
    %v465 = vadd.f32 %v463, %v464
    %v466 = vrot.slane %v465, 1
    %v467 = vadd.f32 %v465, %v466
    %468 = vst [vmem:[#allocation6 + $0x8] sm:$0xff] %v467
    %v469 = vpack.c.bf16 %v438, %v437
    %v470 = vld [vmem:[%s3 + $0x40] sm:$0xf]
    %v471 = vld [vmem:[%s3 + $0x44] sm:$0xf]
    %v472 = vld [vmem:[%s3 + $0x48] sm:$0xf]
    %v473 = vld [vmem:[%s3 + $0x4c] sm:$0xf]
    %v474 = vld [vmem:[%s3 + $0x50] sm:$0xf]
    %v475 = vld [vmem:[%s3 + $0x54] sm:$0xf]
    %v476 = vld [vmem:[%s3 + $0x58] sm:$0xf]
    %v477 = vld [vmem:[%s3 + $0x5c] sm:$0xf]
    %v478 = vld [vmem:[%s3 + $0x60] sm:$0xf]
    %v479 = vld [vmem:[%s3 + $0x64] sm:$0xf]
    %v480 = vld [vmem:[%s3 + $0x68] sm:$0xf]
    %v481 = vld [vmem:[%s3 + $0x6c] sm:$0xf]
    %v482 = vld [vmem:[%s3 + $0x70] sm:$0xf]
    %v483 = vld [vmem:[%s3 + $0x74] sm:$0xf]
    %v484 = vld [vmem:[%s3 + $0x78] sm:$0xf]
    %v485 = vld [vmem:[%s3 + $0x7c] sm:$0xf]
    %v502 = vunpack.c.l.b16 %v470
    %v503 = vunpack.c.l.b16 %v471
    %v504 = vunpack.c.l.b16 %v472
    %v505 = vunpack.c.l.b16 %v473
    %v506 = vunpack.c.l.b16 %v474
    %v507 = vunpack.c.l.b16 %v475
    %v508 = vunpack.c.l.b16 %v476
    %v509 = vunpack.c.l.b16 %v477
    %v510 = vunpack.c.l.b16 %v478
    %v511 = vunpack.c.l.b16 %v479
    %v512 = vunpack.c.l.b16 %v480
    %v513 = vunpack.c.l.b16 %v481
    %v514 = vunpack.c.l.b16 %v482
    %v515 = vunpack.c.l.b16 %v483
    %v516 = vunpack.c.l.b16 %v484
    %v517 = vunpack.c.l.b16 %v485
    %v518 = vpack.c.b16 %v503, %v502
    %v519 = vpack.c.b16 %v505, %v504
    %v520 = vpack.c.b16 %v507, %v506
    %v521 = vpack.c.b16 %v509, %v508
    %v522 = vpack.c.b16 %v511, %v510
    %v523 = vpack.c.b16 %v513, %v512
    %v524 = vpack.c.b16 %v515, %v514
    %v525 = vpack.c.b16 %v517, %v516
    %534 = vmatprep.subr.bf16.mxu0 0
    %535 = vmatpush1.bf16.msra.mxu0 %v518
    %536 = vmatprep.subr.bf16.mxu0 0
    %537 = vmatpush1.bf16.msra.mxu0 %v519
    %538 = vmatprep.subr.bf16.mxu0 0
    %539 = vmatpush1.bf16.msra.mxu0 %v520
    %540 = vmatprep.subr.bf16.mxu0 0
    %541 = vmatpush1.bf16.msra.mxu0 %v521
    %542 = vmatprep.subr.bf16.mxu0 0
    %543 = vmatpush1.bf16.msra.mxu0 %v522
    %544 = vmatprep.subr.bf16.mxu0 0
    %545 = vmatpush1.bf16.msra.mxu0 %v523
    %546 = vmatprep.subr.bf16.mxu0 0
    %547 = vmatpush1.bf16.msra.mxu0 %v524
    %548 = vmatprep.subr.bf16.mxu0 0
    %549 = vmatpush1.bf16.msra.mxu0 %v525
    %550 = vmatprep.subr.bf16.mxu0 0
    %551 = vmatpush1.bf16.msra.mxu0 0
    %552 = vmatprep.subr.bf16.mxu0 0
    %553 = vmatpush1.bf16.msra.mxu0 0
    %554 = vmatprep.subr.bf16.mxu0 0
    %555 = vmatpush1.bf16.msra.mxu0 0
    %556 = vmatprep.subr.bf16.mxu0 0
    %557 = vmatpush1.bf16.msra.mxu0 0
    %558 = vmatprep.subr.bf16.mxu0 0
    %559 = vmatpush1.bf16.msra.mxu0 0
    %560 = vmatprep.subr.bf16.mxu0 0
    %561 = vmatpush1.bf16.msra.mxu0 0
    %562 = vmatprep.subr.bf16.mxu0 0
    %563 = vmatpush1.bf16.msra.mxu0 0
    %564 = vmatprep.subr.bf16.mxu0 0
    %565 = vmatpush1.bf16.msra.mxu0 0
    %566 = vmatprep.mubr.bf16.mxu0 0
    %567 = vmatmul.mubr.bf16.gmra.mrb[0].mxu0 %v469
    %v568 = vpop.f32.mrb[0].mxu0
    %v569 = vadd.f32 0.0, %v568
    %v570 = vpop.f32.mrb[0].mxu0
    %v571 = vpop.f32.mrb[0].mxu0
    %v572 = vadd.f32 0.0, %v571
    %v573 = vpop.f32.mrb[0].mxu0
    %574 = vdwg.mxu0
    %v575 = vadd.f32 %v391, %v569
    %v576 = vadd.f32 %v394, %v572
    %v577 = vld [vmem:[%s4 + $0x40] sm:$0xf]
    %v578 = vld [vmem:[%s4 + $0x44] sm:$0xf]
    %v579 = vld [vmem:[%s4 + $0x48] sm:$0xf]
    %v580 = vld [vmem:[%s4 + $0x4c] sm:$0xf]
    %v581 = vld [vmem:[%s4 + $0x50] sm:$0xf]
    %v582 = vld [vmem:[%s4 + $0x54] sm:$0xf]
    %v583 = vld [vmem:[%s4 + $0x58] sm:$0xf]
    %v584 = vld [vmem:[%s4 + $0x5c] sm:$0xf]
    %v585 = vld [vmem:[%s4 + $0x60] sm:$0xf]
    %v586 = vld [vmem:[%s4 + $0x64] sm:$0xf]
    %v587 = vld [vmem:[%s4 + $0x68] sm:$0xf]
    %v588 = vld [vmem:[%s4 + $0x6c] sm:$0xf]
    %v589 = vld [vmem:[%s4 + $0x70] sm:$0xf]
    %v590 = vld [vmem:[%s4 + $0x74] sm:$0xf]
    %v591 = vld [vmem:[%s4 + $0x78] sm:$0xf]
    %v592 = vld [vmem:[%s4 + $0x7c] sm:$0xf]
    %v609 = vunpack.c.l.b16 %v577
    %v610 = vunpack.c.l.b16 %v578
    %v611 = vunpack.c.l.b16 %v579
    %v612 = vunpack.c.l.b16 %v580
    %v613 = vunpack.c.l.b16 %v581
    %v614 = vunpack.c.l.b16 %v582
    %v615 = vunpack.c.l.b16 %v583
    %v616 = vunpack.c.l.b16 %v584
    %v617 = vunpack.c.l.b16 %v585
    %v618 = vunpack.c.l.b16 %v586
    %v619 = vunpack.c.l.b16 %v587
    %v620 = vunpack.c.l.b16 %v588
    %v621 = vunpack.c.l.b16 %v589
    %v622 = vunpack.c.l.b16 %v590
    %v623 = vunpack.c.l.b16 %v591
    %v624 = vunpack.c.l.b16 %v592
    %v625 = vpack.c.b16 %v610, %v609
    %v626 = vpack.c.b16 %v612, %v611
    %v627 = vpack.c.b16 %v614, %v613
    %v628 = vpack.c.b16 %v616, %v615
    %v629 = vpack.c.b16 %v618, %v617
    %v630 = vpack.c.b16 %v620, %v619
    %v631 = vpack.c.b16 %v622, %v621
    %v632 = vpack.c.b16 %v624, %v623
    %641 = vmatprep.subr.bf16.mxu0 0
    %642 = vmatpush1.bf16.msra.mxu0 %v625
    %643 = vmatprep.subr.bf16.mxu0 0
    %644 = vmatpush1.bf16.msra.mxu0 %v626
    %645 = vmatprep.subr.bf16.mxu0 0
    %646 = vmatpush1.bf16.msra.mxu0 %v627
    %647 = vmatprep.subr.bf16.mxu0 0
    %648 = vmatpush1.bf16.msra.mxu0 %v628
    %649 = vmatprep.subr.bf16.mxu0 0
    %650 = vmatpush1.bf16.msra.mxu0 %v629
    %651 = vmatprep.subr.bf16.mxu0 0
    %652 = vmatpush1.bf16.msra.mxu0 %v630
    %653 = vmatprep.subr.bf16.mxu0 0
    %654 = vmatpush1.bf16.msra.mxu0 %v631
    %655 = vmatprep.subr.bf16.mxu0 0
    %656 = vmatpush1.bf16.msra.mxu0 %v632
    %657 = vmatprep.subr.bf16.mxu0 0
    %658 = vmatpush1.bf16.msra.mxu0 0
    %659 = vmatprep.subr.bf16.mxu0 0
    %660 = vmatpush1.bf16.msra.mxu0 0
    %661 = vmatprep.subr.bf16.mxu0 0
    %662 = vmatpush1.bf16.msra.mxu0 0
    %663 = vmatprep.subr.bf16.mxu0 0
    %664 = vmatpush1.bf16.msra.mxu0 0
    %665 = vmatprep.subr.bf16.mxu0 0
    %666 = vmatpush1.bf16.msra.mxu0 0
    %667 = vmatprep.subr.bf16.mxu0 0
    %668 = vmatpush1.bf16.msra.mxu0 0
    %669 = vmatprep.subr.bf16.mxu0 0
    %670 = vmatpush1.bf16.msra.mxu0 0
    %671 = vmatprep.subr.bf16.mxu0 0
    %672 = vmatpush1.bf16.msra.mxu0 0
    %673 = vmatprep.mubr.bf16.mxu0 0
    %674 = vmatmul.mubr.bf16.gmra.mrb[0].mxu0 %v469
    %v675 = vpop.f32.mrb[0].mxu0
    %v676 = vadd.f32 0.0, %v675
    %v677 = vpop.f32.mrb[0].mxu0
    %v678 = vpop.f32.mrb[0].mxu0
    %v679 = vadd.f32 0.0, %v678
    %v680 = vpop.f32.mrb[0].mxu0
    %681 = vdwg.mxu0
    %v682 = vadd.f32 %v575, %v676
    %v683 = vadd.f32 %v576, %v679
    %vm684 = vcmask 130048
    %685 = vst.msk [vmem:[#allocation2] sm:$0xff] %vm684, %v682
    %686 = vst.msk [vmem:[#allocation2 + $0x8] sm:$0xff] %vm684, %v683
    // Predicated region
    $region22: #{tpu_custom_call.1} parent=1 // pred_check
      _
    $region23: #{tpu_custom_call.1} parent=1 // pred_check_branch
      %688 = sbr.rel (0) target = $region25
    $region24: #{tpu_custom_call.1} parent=1 // pred_region
      %s690 = ssub.s32 256, 256
      %691 = vsyncadd [#allocation3], %s690
      %s692 = sshll.u32 [#allocation2], 4
      %s693 = int_to_ptr.vmem [resolvable:$true] %s692
      %698 = dma.vmem_to_hbm [thread:$0]  %s693, 256, %s5, [#allocation3], 128, 128, 8
    $region25: #{tpu_custom_call.1} parent=1 // pred_fallthru
      _
    // Predicated region
    $region26: #{tpu_custom_call.1} parent=1 // pred_check
      _
    $region27: #{tpu_custom_call.1} parent=1 // pred_check_branch
      %700 = sbr.rel (0) target = $region29
    $region28: #{tpu_custom_call.1} parent=1 // pred_region
      %s702 = ssub.s32 256, 256
      %703 = vsyncadd [#allocation5], %s702
      %s705 = sshll.u32 [#allocation4], 4
      %s706 = int_to_ptr.vmem [resolvable:$true] %s705
      %708 = dma.vmem_to_hbm [thread:$0]  %s706, 256, %s6, [#allocation5]
    $region29: #{tpu_custom_call.1} parent=1 // pred_fallthru
      _
    // Predicated region
    $region30: #{tpu_custom_call.1} parent=1 // pred_check
      _
    $region31: #{tpu_custom_call.1} parent=1 // pred_check_branch
      %710 = sbr.rel (0) target = $region33
    $region32: #{tpu_custom_call.1} parent=1 // pred_region
      %s712 = ssub.s32 256, 256
      %713 = vsyncadd [#allocation5], %s712
      %s715 = sshll.u32 [#allocation6], 4
      %s716 = int_to_ptr.vmem [resolvable:$true] %s715
      %718 = dma.vmem_to_hbm [thread:$0]  %s716, 256, %s7, [#allocation5]
    $region33: #{tpu_custom_call.1} parent=1 // pred_fallthru
      _
    // Predicated region
    $region34: #{tpu_custom_call.1} parent=1 // pred_check
      _
    $region35: #{tpu_custom_call.1} parent=1 // pred_check_branch
      %720 = sbr.rel (0) target = $region37
    $region36: #{tpu_custom_call.1} parent=1 // pred_region
      %721 = dma.done [#allocation3], 256
    $region37: #{tpu_custom_call.1} parent=1 // pred_fallthru
      _
    // Predicated region
    $region38: #{tpu_custom_call.1} parent=1 // pred_check
      _
    $region39: #{tpu_custom_call.1} parent=1 // pred_check_branch
      %723 = sbr.rel (0) target = $region41
    $region40: #{tpu_custom_call.1} parent=1 // pred_region
      %724 = dma.done [#allocation5], 256
    $region41: #{tpu_custom_call.1} parent=1 // pred_fallthru
      _
    // Predicated region
    $region42: #{tpu_custom_call.1} parent=1 // pred_check
      _
    $region43: #{tpu_custom_call.1} parent=1 // pred_check_branch
      %726 = sbr.rel (0) target = $region45
    $region44: #{tpu_custom_call.1} parent=1 // pred_region
      %727 = dma.done [#allocation5], 256
    $region45: #{tpu_custom_call.1} parent=1 // pred_fallthru
      _
    %728 = vsyncpa [#allocation3], 1
    %729 = vsyncpa [#allocation5], 1

</llo_original>
